<compile_context>
chip_gen: v5e
topology: v5e:2x2
jax: 0.10.0
libtpu: 0.0.40
codegen_flags: <defaults>
</compile_context>

<pallas_src>
import functools

import jax
import jax.numpy as jnp
from jax import lax
from jax.experimental import pallas as pl
from jax.experimental.pallas import tpu as pltpu


def single_head_kernel(x_ref, mask_ref, w3_ref, b3_ref, w1_ref, b1_ref,
                       out_ref, *, W):
    # x_ref:    (Bt, Cin_pad, HW)    flattened NCHW activations (lanes = H*W)
    # mask_ref: (9, Bt*HW)           f32 validity masks (host-precomputed,
    #                                tiled over the Bt images of one step)
    # w3_ref:   (Cinter, 9*Cin_pad)  3x3 conv weights, im2col orientation
    # b3_ref:   (Cinter, 1)
    # w1_ref:   (Cout, Cinter)       1x1 conv weights, matmul orientation
    # b1_ref:   (Cout, 1)
    # out_ref:  (Bt, Cout, HW)
    Bt, Cin_p, HW = x_ref.shape
    L = Bt * HW

    # Weights/biases: constant-index_map blocks, resident in VMEM; loads are
    # plain vld's (no redundant DMA per step).
    w3 = w3_ref[...]
    w1 = w1_ref[...]
    b3 = b3_ref[...]
    b1 = b1_ref[...]
    mask = mask_ref[...]                      # (9, L)

    # Concatenate the Bt images along the lane axis (lane-aligned: HW is a
    # multiple of 128) -> one long-N stream for both matmuls.
    if Bt == 1:
        x_all = x_ref[0]                      # (Cin_p, HW)
    else:
        x_all = jnp.concatenate([x_ref[b] for b in range(Bt)], axis=1)

    # Build the (9*Cin_p, L) im2col slab from 9 lane rolls (XLU slot) + masks.
    # y[p] = x[p + s] via cyclic roll; every wrapped (or cross-batch) lane is
    # exactly an out-of-image position and is zeroed by the mask (padding=1).
    offsets = [(dy, dx) for dy in (-1, 0, 1) for dx in (-1, 0, 1)]
    tap_blocks = []
    for k, (dy, dx) in enumerate(offsets):
        s = dy * W + dx
        if s == 0:
            tap_blocks.append(x_all)          # center tap: always valid
        else:
            shifted = pltpu.roll(x_all, shift=(-s) % L, axis=1)
            tap_blocks.append(shifted * mask[k:k + 1, :])
    patches = jnp.concatenate(tap_blocks, axis=0)   # (9*Cin_p, L)

    # conv3x3 as a single MXU matmul over all Bt images, then bias + ReLU.
    hid = jnp.dot(w3, patches, preferred_element_type=jnp.float32) + b3
    hid = jnp.maximum(hid, 0.0)
    # conv1x1 as a second matmul riding the same long-N stream.
    out = jnp.dot(w1, hid, preferred_element_type=jnp.float32) + b1
    out = out.astype(out_ref.dtype)

    # Lane-aligned per-image stores (HW multiple of 128 -> unmasked vst).
    if Bt == 1:
        out_ref[0] = out
    else:
        for b in range(Bt):
            out_ref[b] = out[:, b * HW:(b + 1) * HW]


def _round_up(x, m):
    return (x + m - 1) // m * m


def _pick_batch_block(B, min_steps=8, max_bt=8):
    # Keep enough grid steps for BlockSpec double-buffering to hide the input
    # DMA (and >= several steps/core on v7x megacore); within that constraint
    # take the largest divisor bt <= max_bt so the per-step matmul N is long.
    for bt in range(min(max_bt, B), 0, -1):
        if B % bt == 0 and B // bt >= min(min_steps, B):
            return bt
    return 1


def single_head_forward(x_nchw, w3_hwio, b3, w1_io, b1):
    """x_nchw: (B, Cin, H, W) float32. Returns (B, Cout, H, W)."""
    B, Cin, H, W = x_nchw.shape
    Cinter = w3_hwio.shape[-1]
    Cout = w1_io.shape[-1]
    HW = H * W
    Cin_p = _round_up(Cin, 8)

    bt = _pick_batch_block(B)
    grid = (B // bt,)

    # Activations: free reshape (no transpose, no spatial pad); pad the channel
    # axis to 8 so every im2col tap starts on an 8-sublane boundary.
    x_flat = x_nchw.reshape(B, Cin, HW)
    if Cin_p != Cin:
        x_flat = jnp.pad(x_flat, ((0, 0), (0, Cin_p - Cin), (0, 0)))

    # Weights in matmul orientation; zero-pad the 3x3 weight's input-channel
    # axis to match the padded activations.
    w3_t = jnp.transpose(w3_hwio, (3, 0, 1, 2))             # (Cinter,3,3,Cin)
    if Cin_p != Cin:
        w3_t = jnp.pad(w3_t, ((0, 0), (0, 0), (0, 0), (0, Cin_p - Cin)))
    w3r = w3_t.reshape(Cinter, 9 * Cin_p)
    w1r = jnp.transpose(w1_io)                               # (Cout, Cinter)
    b3c = b3.reshape(Cinter, 1)
    b1c = b1.reshape(Cout, 1)

    # Host-precomputed boundary-validity masks for the 9 taps, tiled over the
    # bt images sharing one grid step (no in-kernel integer divide).
    pos = jnp.arange(HW, dtype=jnp.int32)
    row = pos // W
    col = pos % W
    mask_rows = []
    for dy in (-1, 0, 1):
        for dx in (-1, 0, 1):
            valid = ((row + dy >= 0) & (row + dy < H)
                     & (col + dx >= 0) & (col + dx < W))
            mask_rows.append(valid.astype(jnp.float32))
    masks = jnp.tile(jnp.stack(mask_rows, axis=0), (1, bt))  # (9, bt*HW)

    kernel = functools.partial(single_head_kernel, W=W)

    out_flat = pl.pallas_call(
        kernel,
        out_shape=jax.ShapeDtypeStruct((B, Cout, HW), jnp.float32),
        grid_spec=pltpu.PrefetchScalarGridSpec(
            num_scalar_prefetch=0,
            grid=grid,
            in_specs=[
                pl.BlockSpec((bt, Cin_p, HW), lambda i: (i, 0, 0)),
                pl.BlockSpec((9, bt * HW), lambda i: (0, 0)),
                pl.BlockSpec((Cinter, 9 * Cin_p), lambda i: (0, 0)),
                pl.BlockSpec((Cinter, 1), lambda i: (0, 0)),
                pl.BlockSpec((Cout, Cinter), lambda i: (0, 0)),
                pl.BlockSpec((Cout, 1), lambda i: (0, 0)),
            ],
            out_specs=pl.BlockSpec((bt, Cout, HW), lambda i: (i, 0, 0)),
        ),
        compiler_params=pltpu.CompilerParams(
            dimension_semantics=("parallel",)),
    )(x_flat, masks, w3r, b3c, w1r, b1c)

    return out_flat.reshape(B, Cout, H, W)


def reference_forward(x_nchw, w3_hwio, b3, w1_io, b1):
    """Plain-JAX reference (lax conv) for correctness check."""
    x_nhwc = jnp.transpose(x_nchw, (0, 2, 3, 1))
    y = lax.conv_general_dilated(
        x_nhwc, w3_hwio, window_strides=(1, 1), padding="SAME",
        dimension_numbers=("NHWC", "HWIO", "NHWC"))
    y = jax.nn.relu(y + b3)
    z = jnp.einsum("bhwc,co->bhwo", y, w1_io) + b1
    return jnp.transpose(z, (0, 3, 1, 2))


if __name__ == "__main__":
    # Small shapes consistent with the module:
    # Conv2d(in, inter, 3, pad=1) -> ReLU -> Conv2d(inter, out, 1)
    B, Cin, H, W = 2, 4, 16, 16
    Cinter, Cout = 32, 4

    key = jax.random.PRNGKey(0)
    kx, kw3, kw1 = jax.random.split(key, 3)

    x = jax.random.normal(kx, (B, Cin, H, W), dtype=jnp.float32)

    # Deterministic parameter init (PyTorch-like uniform scale); biases = 0
    # as in init_weights (bias_fill=False path).
    fan3 = Cin * 3 * 3
    w3 = jax.random.uniform(kw3, (3, 3, Cin, Cinter), jnp.float32,
                            minval=-1.0, maxval=1.0) / jnp.sqrt(fan3)
    b3 = jnp.zeros((Cinter,), jnp.float32)
    fan1 = Cinter
    w1 = jax.random.uniform(kw1, (Cinter, Cout), jnp.float32,
                            minval=-1.0, maxval=1.0) / jnp.sqrt(fan1)
    b1 = jnp.zeros((Cout,), jnp.float32)

    out = single_head_forward(x, w3, b3, w1, b1)
    out = jax.block_until_ready(out)

    ref = reference_forward(x, w3, b3, w1, b1)
    assert out.shape == (B, Cout, H, W)
    assert jnp.allclose(out, ref, atol=2e-4, rtol=2e-4), "mismatch vs reference"

    print("KERNEL_OK")
</pallas_src>

<mosaic_0001>
module attributes {stable_mosaic.version = 11 : i64} {
  func.func @single_head_kernel(%arg0: i32, %arg1: memref<1x8x256xf32, #tpu.memory_space<vmem>>, %arg2: memref<9x256xf32, #tpu.memory_space<vmem>>, %arg3: memref<32x72xf32, #tpu.memory_space<vmem>>, %arg4: memref<32x1xf32, #tpu.memory_space<vmem>>, %arg5: memref<4x32xf32, #tpu.memory_space<vmem>>, %arg6: memref<4x1xf32, #tpu.memory_space<vmem>>, %arg7: memref<1x4x256xf32, #tpu.memory_space<vmem>>) attributes {dimension_semantics = [#tpu.dimension_semantics<parallel>], iteration_bounds = array<i64: 2>, scalar_prefetch = 0 : i64, scratch_operands = 0 : i64, tpu.core_type = #tpu.core_type<tc>, window_params = [{transform_indices = @transform_0, window_bounds = array<i64: 1, 8, 256>}, {pipeline_mode = #tpu.pipeline_mode<synchronous>, transform_indices = @transform_1, window_bounds = array<i64: 9, 256>}, {pipeline_mode = #tpu.pipeline_mode<synchronous>, transform_indices = @transform_2, window_bounds = array<i64: 32, 72>}, {pipeline_mode = #tpu.pipeline_mode<synchronous>, transform_indices = @transform_3, window_bounds = array<i64: 32, 1>}, {pipeline_mode = #tpu.pipeline_mode<synchronous>, transform_indices = @transform_4, window_bounds = array<i64: 4, 32>}, {pipeline_mode = #tpu.pipeline_mode<synchronous>, transform_indices = @transform_5, window_bounds = array<i64: 4, 1>}, {transform_indices = @transform_6, window_bounds = array<i64: 1, 4, 256>}]} {
    %c0 = arith.constant 0 : index
    %c0_0 = arith.constant 0 : index
    %0 = vector.load %arg3[%c0, %c0_0] : memref<32x72xf32, #tpu.memory_space<vmem>>, vector<32x72xf32>
    %c0_1 = arith.constant 0 : index
    %c0_2 = arith.constant 0 : index
    %1 = vector.load %arg5[%c0_1, %c0_2] : memref<4x32xf32, #tpu.memory_space<vmem>>, vector<4x32xf32>
    %c0_3 = arith.constant 0 : index
    %c0_4 = arith.constant 0 : index
    %2 = vector.load %arg4[%c0_3, %c0_4] : memref<32x1xf32, #tpu.memory_space<vmem>>, vector<32x1xf32>
    %c0_5 = arith.constant 0 : index
    %c0_6 = arith.constant 0 : index
    %3 = vector.load %arg6[%c0_5, %c0_6] : memref<4x1xf32, #tpu.memory_space<vmem>>, vector<4x1xf32>
    %c0_7 = arith.constant 0 : index
    %c0_8 = arith.constant 0 : index
    %4 = vector.load %arg2[%c0_7, %c0_8] : memref<9x256xf32, #tpu.memory_space<vmem>>, vector<9x256xf32>
    %c0_9 = arith.constant 0 : index
    %c0_10 = arith.constant 0 : index
    %c0_11 = arith.constant 0 : index
    %5 = vector.load %arg1[%c0_9, %c0_10, %c0_11] : memref<1x8x256xf32, #tpu.memory_space<vmem>>, vector<1x8x256xf32>
    %6 = vector.shape_cast %5 : vector<1x8x256xf32> to vector<8x256xf32>
    %c17_i32 = arith.constant 17 : i32
    %7 = tpu.dynamic_rotate %6 by %c17_i32 dim 1 : vector<8x256xf32>, i32 -> vector<8x256xf32>
    %8 = vector.extract_strided_slice %4 {offsets = [0, 0], sizes = [1, 256], strides = [1, 1]} : vector<9x256xf32> to vector<1x256xf32>
    %9 = vector.broadcast %8 : vector<1x256xf32> to vector<8x256xf32>
    %10 = arith.mulf %7, %9 : vector<8x256xf32>
    %c16_i32 = arith.constant 16 : i32
    %11 = tpu.dynamic_rotate %6 by %c16_i32 dim 1 : vector<8x256xf32>, i32 -> vector<8x256xf32>
    %12 = vector.extract_strided_slice %4 {offsets = [1, 0], sizes = [1, 256], strides = [1, 1]} : vector<9x256xf32> to vector<1x256xf32>
    %13 = vector.broadcast %12 : vector<1x256xf32> to vector<8x256xf32>
    %14 = arith.mulf %11, %13 : vector<8x256xf32>
    %c15_i32 = arith.constant 15 : i32
    %15 = tpu.dynamic_rotate %6 by %c15_i32 dim 1 : vector<8x256xf32>, i32 -> vector<8x256xf32>
    %16 = vector.extract_strided_slice %4 {offsets = [2, 0], sizes = [1, 256], strides = [1, 1]} : vector<9x256xf32> to vector<1x256xf32>
    %17 = vector.broadcast %16 : vector<1x256xf32> to vector<8x256xf32>
    %18 = arith.mulf %15, %17 : vector<8x256xf32>
    %c1_i32 = arith.constant 1 : i32
    %19 = tpu.dynamic_rotate %6 by %c1_i32 dim 1 : vector<8x256xf32>, i32 -> vector<8x256xf32>
    %20 = vector.extract_strided_slice %4 {offsets = [3, 0], sizes = [1, 256], strides = [1, 1]} : vector<9x256xf32> to vector<1x256xf32>
    %21 = vector.broadcast %20 : vector<1x256xf32> to vector<8x256xf32>
    %22 = arith.mulf %19, %21 : vector<8x256xf32>
    %c255_i32 = arith.constant 255 : i32
    %23 = tpu.dynamic_rotate %6 by %c255_i32 dim 1 : vector<8x256xf32>, i32 -> vector<8x256xf32>
    %24 = vector.extract_strided_slice %4 {offsets = [5, 0], sizes = [1, 256], strides = [1, 1]} : vector<9x256xf32> to vector<1x256xf32>
    %25 = vector.broadcast %24 : vector<1x256xf32> to vector<8x256xf32>
    %26 = arith.mulf %23, %25 : vector<8x256xf32>
    %c241_i32 = arith.constant 241 : i32
    %27 = tpu.dynamic_rotate %6 by %c241_i32 dim 1 : vector<8x256xf32>, i32 -> vector<8x256xf32>
    %28 = vector.extract_strided_slice %4 {offsets = [6, 0], sizes = [1, 256], strides = [1, 1]} : vector<9x256xf32> to vector<1x256xf32>
    %29 = vector.broadcast %28 : vector<1x256xf32> to vector<8x256xf32>
    %30 = arith.mulf %27, %29 : vector<8x256xf32>
    %c240_i32 = arith.constant 240 : i32
    %31 = tpu.dynamic_rotate %6 by %c240_i32 dim 1 : vector<8x256xf32>, i32 -> vector<8x256xf32>
    %32 = vector.extract_strided_slice %4 {offsets = [7, 0], sizes = [1, 256], strides = [1, 1]} : vector<9x256xf32> to vector<1x256xf32>
    %33 = vector.broadcast %32 : vector<1x256xf32> to vector<8x256xf32>
    %34 = arith.mulf %31, %33 : vector<8x256xf32>
    %c239_i32 = arith.constant 239 : i32
    %35 = tpu.dynamic_rotate %6 by %c239_i32 dim 1 : vector<8x256xf32>, i32 -> vector<8x256xf32>
    %36 = vector.extract_strided_slice %4 {offsets = [8, 0], sizes = [1, 256], strides = [1, 1]} : vector<9x256xf32> to vector<1x256xf32>
    %37 = vector.broadcast %36 : vector<1x256xf32> to vector<8x256xf32>
    %38 = arith.mulf %35, %37 : vector<8x256xf32>
    %39 = tpu.concatenate %10, %14, %18, %22, %6, %26, %30, %34, %38 in 0 : vector<8x256xf32>, vector<8x256xf32>, vector<8x256xf32>, vector<8x256xf32>, vector<8x256xf32>, vector<8x256xf32>, vector<8x256xf32>, vector<8x256xf32>, vector<8x256xf32> -> vector<72x256xf32>
    %cst = arith.constant dense<0.000000e+00> : vector<32x256xf32>
    %40 = tpu.matmul %0, %39, %cst {dimension_numbers = #tpu.dot_dimension_numbers<[1], [0], [0], [1], [0, 0, 1, 1], [], []>} : vector<32x72xf32>, vector<72x256xf32>, vector<32x256xf32> -> vector<32x256xf32>
    %41 = vector.broadcast %2 : vector<32x1xf32> to vector<32x256xf32>
    %42 = arith.addf %40, %41 : vector<32x256xf32>
    %cst_12 = arith.constant 0.000000e+00 : f32
    %43 = vector.broadcast %cst_12 : f32 to vector<32x256xf32>
    %44 = arith.maximumf %42, %43 : vector<32x256xf32>
    %cst_13 = arith.constant dense<0.000000e+00> : vector<4x256xf32>
    %45 = tpu.matmul %1, %44, %cst_13 {dimension_numbers = #tpu.dot_dimension_numbers<[1], [0], [0], [1], [0, 0, 1, 1], [], []>} : vector<4x32xf32>, vector<32x256xf32>, vector<4x256xf32> -> vector<4x256xf32>
    %46 = vector.broadcast %3 : vector<4x1xf32> to vector<4x256xf32>
    %47 = arith.addf %45, %46 : vector<4x256xf32>
    %c0_14 = arith.constant 0 : index
    %c0_15 = arith.constant 0 : index
    %c0_16 = arith.constant 0 : index
    %48 = vector.load %arg7[%c0_14, %c0_15, %c0_16] : memref<1x4x256xf32, #tpu.memory_space<vmem>>, vector<1x4x256xf32>
    %49 = vector.shape_cast %48 : vector<1x4x256xf32> to vector<4x256xf32>
    %50 = vector.shape_cast %47 : vector<4x256xf32> to vector<1x4x256xf32>
    tpu.vector_store %arg7[%c0_14, %c0_15, %c0_16], %50 {strides = array<i32>} : memref<1x4x256xf32, #tpu.memory_space<vmem>>, vector<1x4x256xf32>,
    return
  }
  func.func @transform_0(%arg0: i32) -> (i32, i32, i32) {
    %c0_i32 = arith.constant 0 : i32
    %c0_i32_0 = arith.constant 0 : i32
    %c0_i32_1 = arith.constant 0 : i32
    return %arg0, %c0_i32, %c0_i32_0 : i32, i32, i32
  }
  func.func @transform_1(%arg0: i32) -> (i32, i32) {
    %c0_i32 = arith.constant 0 : i32
    %c0_i32_0 = arith.constant 0 : i32
    %c0_i32_1 = arith.constant 0 : i32
    return %c0_i32, %c0_i32_0 : i32, i32
  }
  func.func @transform_2(%arg0: i32) -> (i32, i32) {
    %c0_i32 = arith.constant 0 : i32
    %c0_i32_0 = arith.constant 0 : i32
    %c0_i32_1 = arith.constant 0 : i32
    return %c0_i32, %c0_i32_0 : i32, i32
  }
  func.func @transform_3(%arg0: i32) -> (i32, i32) {
    %c0_i32 = arith.constant 0 : i32
    %c0_i32_0 = arith.constant 0 : i32
    %c0_i32_1 = arith.constant 0 : i32
    return %c0_i32, %c0_i32_0 : i32, i32
  }
  func.func @transform_4(%arg0: i32) -> (i32, i32) {
    %c0_i32 = arith.constant 0 : i32
    %c0_i32_0 = arith.constant 0 : i32
    %c0_i32_1 = arith.constant 0 : i32
    return %c0_i32, %c0_i32_0 : i32, i32
  }
  func.func @transform_5(%arg0: i32) -> (i32, i32) {
    %c0_i32 = arith.constant 0 : i32
    %c0_i32_0 = arith.constant 0 : i32
    %c0_i32_1 = arith.constant 0 : i32
    return %c0_i32, %c0_i32_0 : i32, i32
  }
  func.func @transform_6(%arg0: i32) -> (i32, i32, i32) {
    %c0_i32 = arith.constant 0 : i32
    %c0_i32_0 = arith.constant 0 : i32
    %c0_i32_1 = arith.constant 0 : i32
    return %arg0, %c0_i32, %c0_i32_0 : i32, i32, i32
  }
}

</mosaic_0001>

<llo_original>
// kernel: tpu_custom_call.1
$region0: #{tpu_custom_call.1}
  #allocation0 [shape = 'u32[]', space=smem, size = 0x4, offset = 0x4, fixed_abs, tag = 'smem constant byte address 0x4 - core index']
  #allocation1 [shape = 'u32[72,128]{1,0:T(1,128)}', space=vmem, size = 0x9000, scoped, tag = 'internal scratch']
  %s0 = inlined_call_operand.vmem [shape: f32[2,8,256], index: 0, kind: input, shape index: {}]
  %s1 = inlined_call_operand.hbm [shape: f32[9,256], index: 1, kind: input, shape index: {}]
  %s2 = inlined_call_operand.hbm [shape: f32[32,72], index: 2, kind: input, shape index: {}]
  %s3 = inlined_call_operand.vmem [shape: f32[32,1], index: 3, kind: input, shape index: {}]
  %s4 = inlined_call_operand.vmem [shape: f32[4,32], index: 4, kind: input, shape index: {}]
  %s5 = inlined_call_operand.vmem [shape: f32[4,1], index: 5, kind: input, shape index: {}]
  %s6 = inlined_call_operand.hbm [shape: f32[2,4,256], index: 6, kind: output, shape index: {}]
  %s7 = sld [smem:[#allocation0]]
  $region65: #{tpu_custom_call.1} parent=0
    _
  %s9 = ssub.s32 1, %s7
  %s10 = scalar_select 0, %s9, %s7
  $region1: #{tpu_custom_call.1} parent=0
    #allocation2 [shape = 'u8[16384]{0}', space=vmem, size = 0x4000, scoped, tag = 'input window, operand 1, single buffered']
    #allocation3 [shape = 's32[2]{0}', space=sflag, size = 0x8, scoped, tag = 'scoped memory for tpu_custom_call.1']
    #allocation4 [shape = 's32[2]{0}', space=sflag, size = 0x8, scoped, tag = 'scoped memory for tpu_custom_call.1']
    #allocation5 [shape = 'u8[16384]{0}', space=vmem, size = 0x4000, scoped, tag = 'input window, operand 2, single buffered']
    #allocation6 [shape = 's32[1]{0}', space=sflag, size = 0x4, scoped, tag = 'scoped memory for tpu_custom_call.1']
    #allocation7 [shape = 'u8[8192]{0}', space=vmem, size = 0x2000, scoped, tag = 'output window, operand 0']
    %11 = vsyncpa [#allocation3], 0
    %12 = vsyncpa [#allocation6], 0
    %13 = vsyncpa [#allocation4], 0
    %s14 = scalar_lea.sflag [#allocation4], 1
    %15 = vsyncpa %s14, 0
    loop: start=0, step=1, limit=4
    $region2: #{tpu_custom_call.1} parent=1 // loop_pre_header
      _
    $region3: #{tpu_custom_call.1} parent=1 // loop_header
      %s17 = sphi 0, %s21
      %p18 = scmp.ge.s32.totalorder %s17, 4
      %s27 = sphi 0, %s29
      %s30 = sphi 0, %s27
      %s31 = sphi 0, %s30
      %s47 = sphi 0, %s31
      %s51 = sphi 0, %s51
      %s53 = sphi 0, %s51
      %s54 = sphi 0, %s53
      %s68 = sphi 0, %s54
      %s72 = sphi 0, %s72
      %s74 = sphi 0, %s72
      %s75 = sphi 0, %s74
      %s89 = sphi 0, %s75
      %s93 = sphi 0, %s93
      %s95 = sphi 0, %s93
      %s96 = sphi 0, %s95
      %s110 = sphi 0, %s96
      %s114 = sphi 0, %s114
      %s116 = sphi 0, %s114
      %s117 = sphi 0, %s116
      %s131 = sphi 0, %s117
      %s135 = sphi 0, %s135
      %s137 = sphi 0, %s135
      %s138 = sphi 0, %s137
      %s152 = sphi 0, %s138
      %s158 = sphi 0, %s160
      %s161 = sphi 0, %s158
      %s162 = sphi 0, %s161
      %s178 = sphi 0, %s162
    $region4: #{tpu_custom_call.1} parent=1 // loop_header_branch
      %20 = sbr.rel (%p18) target = $region8
    $region5: #{tpu_custom_call.1} parent=1 // loop_body
      %s22 = ssub.s32 %s17, 1
      %s23 = ssub.s32 %s17, 2
      %s24 = sadd.s32 %s17, 1
      %s25 = ssub.s32 %s17, %s24
      %p26 = scmp.eq.s32.totalorder %s25, 0
      %s28 = sadd.s32 %s27, 1
      %s29 = scalar_select %p26, %s27, %s28
      %p32 = pneg %p26
      %p33 = scmp.eq.s32.totalorder %s17, 1
      %p34 = por %p32, %p33
      %p35 = scmp.ne.s32.totalorder %s27, %s30
      %p36 = scmp.eq.s32.totalorder %s17, 0
      %p37 = por %p35, %p36
      %p38 = scmp.ne.s32.totalorder %s27, %s30
      %p39 = scmp.eq.s32.totalorder %s22, 1
      %p40 = por %p38, %p39
      %p41 = scmp.ne.s32.totalorder %s30, %s31
      %p42 = scmp.eq.s32.totalorder %s22, 0
      %p43 = por %p41, %p42
      %p44 = scmp.ne.s32.totalorder %s30, %s31
      %p45 = scmp.eq.s32.totalorder %s23, 1
      %p46 = por %p44, %p45
      %p48 = scmp.ne.s32.totalorder %s31, %s47
      %p49 = scmp.eq.s32.totalorder %s23, 0
      %p50 = por %p48, %p49
      %s52 = sadd.s32 %s51, 1
      %p55 = scmp.eq.s32.totalorder %s17, 1
      %p56 = scmp.ne.s32.totalorder %s51, %s53
      %p57 = scmp.eq.s32.totalorder %s17, 0
      %p58 = por %p56, %p57
      %p59 = scmp.ne.s32.totalorder %s51, %s53
      %p60 = scmp.eq.s32.totalorder %s22, 1
      %p61 = por %p59, %p60
      %p62 = scmp.ne.s32.totalorder %s53, %s54
      %p63 = scmp.eq.s32.totalorder %s22, 0
      %p64 = por %p62, %p63
      %p65 = scmp.ne.s32.totalorder %s53, %s54
      %p66 = scmp.eq.s32.totalorder %s23, 1
      %p67 = por %p65, %p66
      %p69 = scmp.ne.s32.totalorder %s54, %s68
      %p70 = scmp.eq.s32.totalorder %s23, 0
      %p71 = por %p69, %p70
      %s73 = sadd.s32 %s72, 1
      %p76 = scmp.eq.s32.totalorder %s17, 1
      %p77 = scmp.ne.s32.totalorder %s72, %s74
      %p78 = scmp.eq.s32.totalorder %s17, 0
      %p79 = por %p77, %p78
      %p80 = scmp.ne.s32.totalorder %s72, %s74
      %p81 = scmp.eq.s32.totalorder %s22, 1
      %p82 = por %p80, %p81
      %p83 = scmp.ne.s32.totalorder %s74, %s75
      %p84 = scmp.eq.s32.totalorder %s22, 0
      %p85 = por %p83, %p84
      %p86 = scmp.ne.s32.totalorder %s74, %s75
      %p87 = scmp.eq.s32.totalorder %s23, 1
      %p88 = por %p86, %p87
      %p90 = scmp.ne.s32.totalorder %s75, %s89
      %p91 = scmp.eq.s32.totalorder %s23, 0
      %p92 = por %p90, %p91
      %s94 = sadd.s32 %s93, 1
      %p97 = scmp.eq.s32.totalorder %s17, 1
      %p98 = scmp.ne.s32.totalorder %s93, %s95
      %p99 = scmp.eq.s32.totalorder %s17, 0
      %p100 = por %p98, %p99
      %p101 = scmp.ne.s32.totalorder %s93, %s95
      %p102 = scmp.eq.s32.totalorder %s22, 1
      %p103 = por %p101, %p102
      %p104 = scmp.ne.s32.totalorder %s95, %s96
      %p105 = scmp.eq.s32.totalorder %s22, 0
      %p106 = por %p104, %p105
      %p107 = scmp.ne.s32.totalorder %s95, %s96
      %p108 = scmp.eq.s32.totalorder %s23, 1
      %p109 = por %p107, %p108
      %p111 = scmp.ne.s32.totalorder %s96, %s110
      %p112 = scmp.eq.s32.totalorder %s23, 0
      %p113 = por %p111, %p112
      %s115 = sadd.s32 %s114, 1
      %p118 = scmp.eq.s32.totalorder %s17, 1
      %p119 = scmp.ne.s32.totalorder %s114, %s116
      %p120 = scmp.eq.s32.totalorder %s17, 0
      %p121 = por %p119, %p120
      %p122 = scmp.ne.s32.totalorder %s114, %s116
      %p123 = scmp.eq.s32.totalorder %s22, 1
      %p124 = por %p122, %p123
      %p125 = scmp.ne.s32.totalorder %s116, %s117
      %p126 = scmp.eq.s32.totalorder %s22, 0
      %p127 = por %p125, %p126
      %p128 = scmp.ne.s32.totalorder %s116, %s117
      %p129 = scmp.eq.s32.totalorder %s23, 1
      %p130 = por %p128, %p129
      %p132 = scmp.ne.s32.totalorder %s117, %s131
      %p133 = scmp.eq.s32.totalorder %s23, 0
      %p134 = por %p132, %p133
      %s136 = sadd.s32 %s135, 1
      %p139 = scmp.eq.s32.totalorder %s17, 1
      %p140 = scmp.ne.s32.totalorder %s135, %s137
      %p141 = scmp.eq.s32.totalorder %s17, 0
      %p142 = por %p140, %p141
      %p143 = scmp.ne.s32.totalorder %s135, %s137
      %p144 = scmp.eq.s32.totalorder %s22, 1
      %p145 = por %p143, %p144
      %p146 = scmp.ne.s32.totalorder %s137, %s138
      %p147 = scmp.eq.s32.totalorder %s22, 0
      %p148 = por %p146, %p147
      %p149 = scmp.ne.s32.totalorder %s137, %s138
      %p150 = scmp.eq.s32.totalorder %s23, 1
      %p151 = por %p149, %p150
      %p153 = scmp.ne.s32.totalorder %s138, %s152
      %p154 = scmp.eq.s32.totalorder %s23, 0
      %p155 = por %p153, %p154
      %s156 = ssub.s32 %s17, %s24
      %p157 = scmp.eq.s32.totalorder %s156, 0
      %s159 = sadd.s32 %s158, 1
      %s160 = scalar_select %p157, %s158, %s159
      %p163 = pneg %p157
      %p164 = scmp.eq.s32.totalorder %s17, 1
      %p165 = por %p163, %p164
      %p166 = scmp.ne.s32.totalorder %s158, %s161
      %p167 = scmp.eq.s32.totalorder %s17, 0
      %p168 = por %p166, %p167
      %p169 = scmp.ne.s32.totalorder %s158, %s161
      %p170 = scmp.eq.s32.totalorder %s22, 1
      %p171 = por %p169, %p170
      %p172 = scmp.ne.s32.totalorder %s161, %s162
      %p173 = scmp.eq.s32.totalorder %s22, 0
      %p174 = por %p172, %p173
      %p175 = scmp.ne.s32.totalorder %s161, %s162
      %p176 = scmp.eq.s32.totalorder %s23, 1
      %p177 = por %p175, %p176
      %p179 = scmp.ne.s32.totalorder %s162, %s178
      %p180 = scmp.eq.s32.totalorder %s23, 0
      %p181 = por %p179, %p180
      %p182 = scmp.le.s32.totalorder 1, %s17
      %p183 = scmp.lt.s32.totalorder %s17, 3
      %p184 = pnand %p182, %p183
      %p185 = pneg %p184
      // Predicated region
      $region9: #{tpu_custom_call.1} parent=5 // pred_check
        _
      $region10: #{tpu_custom_call.1} parent=5 // pred_check_branch
        %187 = sbr.rel (%p184) target = $region12
      $region11: #{tpu_custom_call.1} parent=5 // pred_region
        %s188 = ssub.s32 %s17, 1
        // Predicated region
        $region13: #{tpu_custom_call.1} parent=11 // pred_check
          %p189 = pneg %p64
        $region14: #{tpu_custom_call.1} parent=11 // pred_check_branch
          %191 = sbr.rel (%p189) target = $region16
        $region15: #{tpu_custom_call.1} parent=11 // pred_region
          %193 = vsyncadd [#allocation3], 0
          %s194 = sshll.u32 %s1, 4
          %s195 = int_to_ptr.hbm [resolvable:$true] %s194
          %s196 = sshll.u32 [#allocation2], 4
          %s197 = int_to_ptr.vmem [resolvable:$true] %s196
          %202 = dma.hbm_to_vmem [thread:$0]  %s195, 512, %s197, [#allocation3], 256, 256, 16
        $region16: #{tpu_custom_call.1} parent=11 // pred_fallthru
          _
        // Predicated region
        $region17: #{tpu_custom_call.1} parent=11 // pred_check
          %p203 = pneg %p85
        $region18: #{tpu_custom_call.1} parent=11 // pred_check_branch
          %205 = sbr.rel (%p203) target = $region20
        $region19: #{tpu_custom_call.1} parent=11 // pred_region
          %207 = vsyncadd [#allocation6], 0
          %s208 = sshll.u32 %s2, 4
          %s209 = int_to_ptr.hbm [resolvable:$true] %s208
          %s210 = sshll.u32 [#allocation5], 4
          %s211 = int_to_ptr.vmem [resolvable:$true] %s210
          %216 = dma.hbm_to_vmem [thread:$0]  %s209, 512, %s211, [#allocation6], 128, 128, 8
        $region20: #{tpu_custom_call.1} parent=11 // pred_fallthru
          _
        // Predicated region
        $region21: #{tpu_custom_call.1} parent=11 // pred_check
          %p217 = pneg %p106
        $region22: #{tpu_custom_call.1} parent=11 // pred_check_branch
          %219 = sbr.rel (%p217) target = $region24
        $region23: #{tpu_custom_call.1} parent=11 // pred_region
          _
        $region24: #{tpu_custom_call.1} parent=11 // pred_fallthru
          _
        // Predicated region
        $region25: #{tpu_custom_call.1} parent=11 // pred_check
          %p220 = pneg %p127
        $region26: #{tpu_custom_call.1} parent=11 // pred_check_branch
          %222 = sbr.rel (%p220) target = $region28
        $region27: #{tpu_custom_call.1} parent=11 // pred_region
          _
        $region28: #{tpu_custom_call.1} parent=11 // pred_fallthru
          _
        // Predicated region
        $region29: #{tpu_custom_call.1} parent=11 // pred_check
          %p223 = pneg %p148
        $region30: #{tpu_custom_call.1} parent=11 // pred_check_branch
          %225 = sbr.rel (%p223) target = $region32
        $region31: #{tpu_custom_call.1} parent=11 // pred_region
          _
        $region32: #{tpu_custom_call.1} parent=11 // pred_fallthru
          _
      $region12: #{tpu_custom_call.1} parent=5 // pred_fallthru
        _
      %p226 = scmp.lt.s32.totalorder %s17, 2
      // Predicated region
      $region33: #{tpu_custom_call.1} parent=5 // pred_check
        %p227 = pneg %p226
      $region34: #{tpu_custom_call.1} parent=5 // pred_check_branch
        %229 = sbr.rel (%p227) target = $region36
      $region35: #{tpu_custom_call.1} parent=5 // pred_region
        // Predicated region
        $region37: #{tpu_custom_call.1} parent=35 // pred_check
          %p230 = pneg %p37
        $region38: #{tpu_custom_call.1} parent=35 // pred_check_branch
          %232 = sbr.rel (%p230) target = $region40
        $region39: #{tpu_custom_call.1} parent=35 // pred_region
          %p233 = scmp.lt.s32.totalorder %s17, 1
          %s234 = scalar_select %p233, %s17, 1
          %s235 = smul.addr %s234, 2
          %s236 = smul.addr %s235, 8
          %s237 = scalar_lea.vmem %s0, %s236
        $region40: #{tpu_custom_call.1} parent=35 // pred_fallthru
          _
      $region36: #{tpu_custom_call.1} parent=5 // pred_fallthru
        _
      %p238 = scmp.le.s32.totalorder 1, %s17
      %p239 = scmp.lt.s32.totalorder %s17, 3
      %p240 = pnand %p238, %p239
      %p241 = pneg %p240
      // Predicated region
      $region41: #{tpu_custom_call.1} parent=5 // pred_check
        _
      $region42: #{tpu_custom_call.1} parent=5 // pred_check_branch
        %243 = sbr.rel (%p240) target = $region44
      $region43: #{tpu_custom_call.1} parent=5 // pred_region
        %s244 = ssub.s32 %s17, 1
        // Predicated region
        $region45: #{tpu_custom_call.1} parent=43 // pred_check
          %p245 = pneg %p64
        $region46: #{tpu_custom_call.1} parent=43 // pred_check_branch
          %247 = sbr.rel (%p245) target = $region48
        $region47: #{tpu_custom_call.1} parent=43 // pred_region
          %249 = dma.done [#allocation3], 512
        $region48: #{tpu_custom_call.1} parent=43 // pred_fallthru
          _
        // Predicated region
        $region49: #{tpu_custom_call.1} parent=43 // pred_check
          %p250 = pneg %p85
        $region50: #{tpu_custom_call.1} parent=43 // pred_check_branch
          %252 = sbr.rel (%p250) target = $region52
        $region51: #{tpu_custom_call.1} parent=43 // pred_region
          %254 = dma.done [#allocation6], 512
        $region52: #{tpu_custom_call.1} parent=43 // pred_fallthru
          _
        %p255 = scmp.lt.s32.totalorder %s22, 1
        %s256 = scalar_select %p255, %s22, 1
        %s257 = smul.addr %s256, 2
        %s258 = smul.addr %s257, 8
        %s259 = scalar_lea.vmem %s0, %s258
        %p260 = pneg %p43
        %p261 = pneg %p40
        %p262 = pneg %p64
        %p263 = pneg %p61
        %p264 = pneg %p85
        %p265 = pneg %p82
        %p266 = pneg %p106
        %p267 = pneg %p103
        %p268 = pneg %p127
        %p269 = pneg %p124
        %p270 = pneg %p148
        %p271 = pneg %p145
        %p272 = pneg %p174
        %p273 = pneg %p171
        %s274 = sand.u32 %s161, 1
        %s275 = scalar_lea.sflag [#allocation4], %s274
        %s276 = sand.u32 %s161, 1
        %s277 = smul.addr %s276, 8
        %s278 = scalar_lea.vmem [#allocation7], %s277
        %p279 = scmp.lt.s32.totalorder %s22, 1
        %s280 = scalar_select %p279, %s22, 1
        %s281 = smul.addr %s280, 2
        %s282 = smul.addr %s281, 8
        %s283 = scalar_lea.vmem %s0, %s282
        %v284 = vld [vmem:[#allocation5] sm:$0xff]
        %v285 = vld [vmem:[#allocation5 + $0x8] sm:$0xff]
        %v286 = vld [vmem:[#allocation5 + $0x10] sm:$0xff]
        %v287 = vld [vmem:[#allocation5 + $0x18] sm:$0xff]
        %v288 = vld [vmem:[%s4] sm:$0xf]
        %v289 = vld [vmem:[%s3] sm:$0xff]
        %v290 = vld [vmem:[%s3 + $0x8] sm:$0xff]
        %v291 = vld [vmem:[%s3 + $0x10] sm:$0xff]
        %v292 = vld [vmem:[%s3 + $0x18] sm:$0xff]
        %v293 = vld [vmem:[%s5] sm:$0xf]
        %v294 = vld [vmem:[#allocation2] sm:$0xff]
        %v295 = vld [vmem:[#allocation2 + $0x8] sm:$0xff]
        %v296 = vld [vmem:[#allocation2 + $0x10] sm:$0x1]
        %v297 = vld [vmem:[#allocation2 + $0x18] sm:$0x1]
        %v298 = vld [vmem:[%s283] sm:$0xff]
        %v299 = vld [vmem:[%s283 + $0x8] sm:$0xff]
        %300 = vrot.lane.b32.xlu0 %v298, 17
        %v301 = vpop.permute.xlu0 %300
        %302 = vrot.lane.b32.xlu0 %v299, 17
        %v303 = vpop.permute.xlu0 %302
        %v304 = vlaneseq
        %v305 = vand.u32 %v304, 127
        %vm306 = vcmp.lt.s32.totalorder %v305, 17
        %v307 = vsel %vm306, %v301, %v303
        %v308 = vsel %vm306, %v303, %v301
        %v309 = vperm.slane %v294, 0
        %v310 = vperm.slane %v295, 0
        %v311 = vmul.f32 %v308, %v309
        %v312 = vmul.f32 %v307, %v310
        %313 = vrot.lane.b32.xlu0 %v298, 16
        %v314 = vpop.permute.xlu0 %313
        %315 = vrot.lane.b32.xlu0 %v299, 16
        %v316 = vpop.permute.xlu0 %315
        %vm317 = vcmp.lt.s32.totalorder %v305, 16
        %v318 = vsel %vm317, %v314, %v316
        %v319 = vsel %vm317, %v316, %v314
        %v320 = vperm.slane %v294, 1
        %v321 = vperm.slane %v295, 1
        %v322 = vmul.f32 %v319, %v320
        %v323 = vmul.f32 %v318, %v321
        %324 = vrot.lane.b32.xlu0 %v298, 15
        %v325 = vpop.permute.xlu0 %324
        %326 = vrot.lane.b32.xlu0 %v299, 15
        %v327 = vpop.permute.xlu0 %326
        %vm328 = vcmp.lt.s32.totalorder %v305, 15
        %v329 = vsel %vm328, %v325, %v327
        %v330 = vsel %vm328, %v327, %v325
        %v331 = vperm.slane %v294, 2
        %v332 = vperm.slane %v295, 2
        %v333 = vmul.f32 %v330, %v331
        %v334 = vmul.f32 %v329, %v332
        %335 = vrot.lane.b32.xlu0 %v298, 1
        %v336 = vpop.permute.xlu0 %335
        %337 = vrot.lane.b32.xlu0 %v299, 1
        %v338 = vpop.permute.xlu0 %337
        %vm339 = vcmp.lt.s32.totalorder %v305, 1
        %v340 = vsel %vm339, %v336, %v338
        %v341 = vsel %vm339, %v338, %v336
        %v342 = vperm.slane %v294, 3
        %v343 = vperm.slane %v295, 3
        %v344 = vmul.f32 %v341, %v342
        %v345 = vmul.f32 %v340, %v343
        %346 = vrot.lane.b32.xlu0 %v298, 127
        %v347 = vpop.permute.xlu0 %346
        %348 = vrot.lane.b32.xlu0 %v299, 127
        %v349 = vpop.permute.xlu0 %348
        %vm350 = vcmp.lt.s32.totalorder %v305, 127
        %v351 = vsel %vm350, %v347, %v349
        %v352 = vsel %vm350, %v349, %v347
        %v353 = vperm.slane %v294, 5
        %v354 = vperm.slane %v295, 5
        %v355 = vmul.f32 %v351, %v353
        %v356 = vmul.f32 %v352, %v354
        %357 = vrot.lane.b32.xlu0 %v298, 113
        %v358 = vpop.permute.xlu0 %357
        %359 = vrot.lane.b32.xlu0 %v299, 113
        %v360 = vpop.permute.xlu0 %359
        %vm361 = vcmp.lt.s32.totalorder %v305, 113
        %v362 = vsel %vm361, %v358, %v360
        %v363 = vsel %vm361, %v360, %v358
        %v364 = vperm.slane %v294, 6
        %v365 = vperm.slane %v295, 6
        %v366 = vmul.f32 %v362, %v364
        %v367 = vmul.f32 %v363, %v365
        %368 = vrot.lane.b32.xlu0 %v298, 112
        %v369 = vpop.permute.xlu0 %368
        %370 = vrot.lane.b32.xlu0 %v299, 112
        %v371 = vpop.permute.xlu0 %370
        %vm372 = vcmp.lt.s32.totalorder %v305, 112
        %v373 = vsel %vm372, %v369, %v371
        %v374 = vsel %vm372, %v371, %v369
        %v375 = vperm.slane %v294, 7
        %v376 = vperm.slane %v295, 7
        %v377 = vmul.f32 %v373, %v375
        %v378 = vmul.f32 %v374, %v376
        %379 = vrot.lane.b32.xlu0 %v298, 111
        %v380 = vpop.permute.xlu0 %379
        %381 = vrot.lane.b32.xlu0 %v299, 111
        %v382 = vpop.permute.xlu0 %381
        %vm383 = vcmp.lt.s32.totalorder %v305, 111
        %v384 = vsel %vm383, %v380, %v382
        %v385 = vsel %vm383, %v382, %v380
        %v386 = vperm.slane %v296, 0
        %v387 = vperm.slane %v297, 0
        %v388 = vmul.f32 %v384, %v386
        %v389 = vmul.f32 %v385, %v387
        %391 = vset.pattern.permute.xlu0 0
        %392 = vperm.xlu0 %391, %v289
        %v393 = vpop.permute.xlu0 %392
        %396 = vset.pattern.permute.xlu0 0
        %397 = vperm.xlu0 %396, %v290
        %v398 = vpop.permute.xlu0 %397
        %401 = vset.pattern.permute.xlu0 0
        %402 = vperm.xlu0 %401, %v291
        %v403 = vpop.permute.xlu0 %402
        %406 = vset.pattern.permute.xlu0 0
        %407 = vperm.xlu0 %406, %v292
        %v408 = vpop.permute.xlu0 %407
        %vm410 = vcmask 588800
        %v412 = vsel %vm410, %v284, 0
        %v415 = vsel %vm410, %v285, 0
        %v418 = vsel %vm410, %v286, 0
        %v421 = vsel %vm410, %v287, 0
        %423 = vmatpush.msra.mxu0 0.0
        %424 = vmatpush.msra.mxu0 0.0
        %425 = vmatpush.msra.mxu0 0.0
        %426 = vmatpush.msra.mxu0 0.0
        %427 = vmatpush.msra.mxu0 0.0
        %428 = vmatpush.msra.mxu0 0.0
        %429 = vmatpush.msra.mxu0 0.0
        %430 = vmatpush.msra.mxu0 %v388
        %431 = vmatpush.msra.mxu0 %v377
        %432 = vmatpush.msra.mxu0 %v366
        %433 = vmatpush.msra.mxu0 %v355
        %434 = vmatpush.msra.mxu0 %v298
        %435 = vmatpush.msra.mxu0 %v344
        %436 = vmatpush.msra.mxu0 %v333
        %437 = vmatpush.msra.mxu0 %v322
        %438 = vmatpush.msra.mxu0 %v311
        %439 = vmatmul.f32.gmra.mxu0 %v412
        %v440 = vpop.f32.mrf.mxu0
        %v441 = vadd.f32 %v393, %v440
        %442 = vmatmul.f32.gmra.mxu0 %v415
        %v443 = vpop.f32.mrf.mxu0
        %v444 = vadd.f32 %v398, %v443
        %445 = vmatmul.f32.gmra.mxu0 %v418
        %v446 = vpop.f32.mrf.mxu0
        %v447 = vadd.f32 %v403, %v446
        %448 = vmatmul.f32.gmra.mxu0 %v421
        %v449 = vpop.f32.mrf.mxu0
        %v450 = vadd.f32 %v408, %v449
        %451 = vdwg.mxu0
        %452 = vmatpush.msra.mxu0 0.0
        %453 = vmatpush.msra.mxu0 0.0
        %454 = vmatpush.msra.mxu0 0.0
        %455 = vmatpush.msra.mxu0 0.0
        %456 = vmatpush.msra.mxu0 0.0
        %457 = vmatpush.msra.mxu0 0.0
        %458 = vmatpush.msra.mxu0 0.0
        %459 = vmatpush.msra.mxu0 %v389
        %460 = vmatpush.msra.mxu0 %v378
        %461 = vmatpush.msra.mxu0 %v367
        %462 = vmatpush.msra.mxu0 %v356
        %463 = vmatpush.msra.mxu0 %v299
        %464 = vmatpush.msra.mxu0 %v345
        %465 = vmatpush.msra.mxu0 %v334
        %466 = vmatpush.msra.mxu0 %v323
        %467 = vmatpush.msra.mxu0 %v312
        %468 = vmatmul.f32.gmra.mxu0 %v412
        %v469 = vpop.f32.mrf.mxu0
        %v470 = vadd.f32 %v393, %v469
        %471 = vmatmul.f32.gmra.mxu0 %v415
        %v472 = vpop.f32.mrf.mxu0
        %v473 = vadd.f32 %v398, %v472
        %474 = vmatmul.f32.gmra.mxu0 %v418
        %v475 = vpop.f32.mrf.mxu0
        %v476 = vadd.f32 %v403, %v475
        %477 = vmatmul.f32.gmra.mxu0 %v421
        %v478 = vpop.f32.mrf.mxu0
        %v479 = vadd.f32 %v408, %v478
        %480 = vdwg.mxu0
        %v481 = vmax.f32 %v441, 0.0
        %v482 = vmax.f32 %v470, 0.0
        %v483 = vmax.f32 %v444, 0.0
        %v484 = vmax.f32 %v473, 0.0
        %v485 = vmax.f32 %v447, 0.0
        %v486 = vmax.f32 %v476, 0.0
        %v487 = vmax.f32 %v450, 0.0
        %v488 = vmax.f32 %v479, 0.0
        %490 = vset.pattern.permute.xlu0 0
        %491 = vperm.xlu0 %490, %v293
        %v492 = vpop.permute.xlu0 %491
        %vm494 = vcmask 261120
        %v496 = vsel %vm494, %v288, 0
        %498 = vmatpush.msra.mxu0 0.0
        %499 = vmatpush.msra.mxu0 0.0
        %500 = vmatpush.msra.mxu0 0.0
        %501 = vmatpush.msra.mxu0 0.0
        %502 = vmatpush.msra.mxu0 0.0
        %503 = vmatpush.msra.mxu0 0.0
        %504 = vmatpush.msra.mxu0 0.0
        %505 = vmatpush.msra.mxu0 0.0
        %506 = vmatpush.msra.mxu0 0.0
        %507 = vmatpush.msra.mxu0 0.0
        %508 = vmatpush.msra.mxu0 0.0
        %509 = vmatpush.msra.mxu0 0.0
        %510 = vmatpush.msra.mxu0 %v487
        %511 = vmatpush.msra.mxu0 %v485
        %512 = vmatpush.msra.mxu0 %v483
        %513 = vmatpush.msra.mxu0 %v481
        %514 = vmatmul.f32.gmra.mxu0 %v496
        %v515 = vpop.f32.mrf.mxu0
        %v516 = vadd.f32 %v492, %v515
        %517 = vdwg.mxu0
        %518 = vmatpush.msra.mxu0 0.0
        %519 = vmatpush.msra.mxu0 0.0
        %520 = vmatpush.msra.mxu0 0.0
        %521 = vmatpush.msra.mxu0 0.0
        %522 = vmatpush.msra.mxu0 0.0
        %523 = vmatpush.msra.mxu0 0.0
        %524 = vmatpush.msra.mxu0 0.0
        %525 = vmatpush.msra.mxu0 0.0
        %526 = vmatpush.msra.mxu0 0.0
        %527 = vmatpush.msra.mxu0 0.0
        %528 = vmatpush.msra.mxu0 0.0
        %529 = vmatpush.msra.mxu0 0.0
        %530 = vmatpush.msra.mxu0 %v488
        %531 = vmatpush.msra.mxu0 %v486
        %532 = vmatpush.msra.mxu0 %v484
        %533 = vmatpush.msra.mxu0 %v482
        %534 = vmatmul.f32.gmra.mxu0 %v496
        %v535 = vpop.f32.mrf.mxu0
        %v536 = vadd.f32 %v492, %v535
        %537 = vdwg.mxu0
        %v540 = vrot.slane %v536, 4
        %vm541 = vcmask 1043456
        %v542 = vsel %vm541, %v516, %v540
        %544 = vst [vmem:[%s278] sm:$0xff] %v542
        %s545 = sand.u32 %s161, 1
        %s546 = scalar_lea.sflag [#allocation4], %s545
        %s547 = sand.u32 %s161, 1
        %s548 = smul.addr %s547, 8
        %s549 = scalar_lea.vmem [#allocation7], %s548
        // Predicated region
        $region53: #{tpu_custom_call.1} parent=43 // pred_check
          %p550 = pneg %p171
        $region54: #{tpu_custom_call.1} parent=43 // pred_check_branch
          %552 = sbr.rel (%p550) target = $region56
        $region55: #{tpu_custom_call.1} parent=43 // pred_region
          %554 = vsyncadd %s546, 0
          %s555 = smul.addr %s22, 2
          %s556 = smul.addr %s555, 4
          %s557 = scalar_lea.hbm %s6, %s556
          %s559 = sshll.u32 %s549, 4
          %s560 = int_to_ptr.vmem [resolvable:$true] %s559
          %s561 = sshll.u32 %s557, 4
          %s562 = int_to_ptr.hbm [resolvable:$true] %s561
          %564 = dma.vmem_to_hbm [thread:$0]  %s560, 128, %s562, %s546
        $region56: #{tpu_custom_call.1} parent=43 // pred_fallthru
          _
      $region44: #{tpu_custom_call.1} parent=5 // pred_fallthru
        _
      %p565 = scmp.le.s32.totalorder 2, %s17
      // Predicated region
      $region57: #{tpu_custom_call.1} parent=5 // pred_check
        %p566 = pneg %p565
      $region58: #{tpu_custom_call.1} parent=5 // pred_check_branch
        %568 = sbr.rel (%p566) target = $region60
      $region59: #{tpu_custom_call.1} parent=5 // pred_region
        %s569 = ssub.s32 %s17, 2
        // Predicated region
        $region61: #{tpu_custom_call.1} parent=59 // pred_check
          %p570 = pneg %p177
        $region62: #{tpu_custom_call.1} parent=59 // pred_check_branch
          %572 = sbr.rel (%p570) target = $region64
        $region63: #{tpu_custom_call.1} parent=59 // pred_region
          %s573 = sand.u32 %s162, 1
          %s574 = scalar_lea.sflag [#allocation4], %s573
          %s575 = sand.u32 %s162, 1
          %s576 = smul.addr %s575, 8
          %s577 = scalar_lea.vmem [#allocation7], %s576
          %579 = dma.done %s574, 128
        $region64: #{tpu_custom_call.1} parent=59 // pred_fallthru
          _
      $region60: #{tpu_custom_call.1} parent=5 // pred_fallthru
        _
    $region6: #{tpu_custom_call.1} parent=1 // loop_footer
      %s21 = sadd.s32 1, %s17
    $region7: #{tpu_custom_call.1} parent=1 // loop_footer_branch
      %16 = sbr.rel target = $region3
    $region8: #{tpu_custom_call.1} parent=1 // loop_exit
      _
    %580 = vsyncpa [#allocation3], 1
    %s581 = scalar_lea.sflag [#allocation3], 1
    %582 = vsyncpa %s581, 1
    %583 = vsyncpa [#allocation6], 1
    %584 = vsyncpa [#allocation4], 1
    %s585 = scalar_lea.sflag [#allocation4], 1
    %586 = vsyncpa %s585, 1

</llo_original>
